<compile_context>
chip_gen: v7x
topology: tpu7x:2x2x1
jax: 0.10.0
libtpu: 0.0.40
codegen_flags: <defaults>
</compile_context>

<pallas_src>
import functools
import math

import jax
import jax.numpy as jnp
from jax import lax
from jax.experimental import pallas as pl
from jax.experimental.pallas import tpu as pltpu


# ----------------------------------------------------------------------------
# Walk schedule + precomposed rotation matrix (glue, plain JAX)
# ----------------------------------------------------------------------------
def _make_walk_schedule(dim, seed, n_steps, angles):
    """Deterministic pair/angle schedule for the Kac random walk."""
    key = jax.random.PRNGKey(seed)
    ki, kj = jax.random.split(key)
    ii = jax.random.randint(ki, (n_steps,), 0, dim, dtype=jnp.int32)
    jr = jax.random.randint(kj, (n_steps,), 0, dim - 1, dtype=jnp.int32)
    jj = jr + (jr >= ii).astype(jnp.int32)            # ensure j != i
    theta = angles.astype(jnp.float32)[jnp.arange(n_steps) % dim]
    return ii, jj, jnp.cos(theta), jnp.sin(theta)


def _build_rotation(dim, seed, n_steps, angles):
    """Precompose the n_steps Givens rotations into a dense (dim, dim) matrix R
    such that x_walked = x @ R.

    Built as R^T with ROW updates (cheap sublane-axis dynamic slices) and
    transposed once at the end, instead of per-step lane-axis column updates.
    """
    ii, jj, cos_t, sin_t = _make_walk_schedule(dim, seed, n_steps, angles)

    def body(t, rt):                                  # rt accumulates R^T
        i, j, c, s = ii[t], jj[t], cos_t[t], sin_t[t]
        ri = rt[i, :]
        rj = rt[j, :]
        rt = rt.at[i, :].set(c * ri + s * rj)
        rt = rt.at[j, :].set(-s * ri + c * rj)
        return rt

    rt = lax.fori_loop(0, n_steps, body, jnp.eye(dim, dtype=jnp.float32))
    return rt.T


# ----------------------------------------------------------------------------
# Pallas kernel: y_tile = x_tile @ R_block   (bf16 MXU operands, f32 accum)
# ----------------------------------------------------------------------------
def _kac_matmul_kernel(x_ref, r_ref, o_ref, *, compute_dtype):
    x = x_ref[...].astype(compute_dtype)
    o_ref[...] = jnp.dot(
        x, r_ref[...], preferred_element_type=jnp.float32
    ).astype(o_ref.dtype)


def _round_up(v, m):
    return ((v + m - 1) // m) * m


def _pick_tile(total, max_tile, align):
    """Largest multiple of `align`, <= max_tile, that divides `total`."""
    t = min(max_tile, total)
    t = max(align, (t // align) * align)
    while total % t != 0:
        t -= align
    return t


_VMEM_BUDGET = 20 * 1024 * 1024   # planning target (fits v7x / default scoped VMEM)
_VMEM_LIMIT = 32 * 1024 * 1024    # scoped-VMEM limit passed to Mosaic


# ----------------------------------------------------------------------------
# Public wrapper: ParametricKacLayer.forward
# ----------------------------------------------------------------------------
def parametric_kac_layer(x, angles, *, seed=2024, n_steps=None,
                         row_tile=1024, compute_dtype=jnp.bfloat16):
    dim = angles.shape[0]
    if n_steps is None:
        n_steps = math.ceil(math.log2(dim) * 0.3) * dim

    out_dtype = x.dtype
    x2d = x.reshape(-1, dim)                          # native dtype, no f32 pass
    rows = x2d.shape[0]

    # Precompose the full walk once (outside the kernel).
    # TODO(synk): cache R across forward calls when (angles, seed, n_steps)
    # are unchanged to remove it from the steady-state path entirely.
    R = _build_rotation(dim, seed * 2, n_steps, angles).astype(compute_dtype)

    # Explicit zero padding only on the contraction/lane axis (dim -> x128).
    # The row (M) axis is left unpadded; Pallas masks the partial last block.
    dim_p = _round_up(dim, 128)
    if dim_p != dim:
        x2d = jnp.pad(x2d, ((0, 0), (0, dim_p - dim)))
        R = jnp.pad(R, ((0, dim_p - dim), (0, dim_p - dim)))

    x_sz = x2d.dtype.itemsize
    o_sz = jnp.dtype(out_dtype).itemsize
    r_sz = jnp.dtype(compute_dtype).itemsize

    # Row tile: large (amortize per-step overhead) but capped so at least two
    # row tiles exist (both v7x TensorCores get work on the "parallel" axis).
    tb_cap = min(row_tile, max(8, _round_up(-(-rows // 2), 8)))

    kernel = functools.partial(_kac_matmul_kernel, compute_dtype=compute_dtype)
    cost = pl.CostEstimate(
        flops=2 * rows * dim_p * dim_p,
        transcendentals=0,
        bytes_accessed=rows * dim_p * (x_sz + o_sz) + dim_p * dim_p * r_sz)

    def resident_vmem(tb):   # conservative: double-buffer everything
        return 2 * (dim_p * dim_p * r_sz + tb * dim_p * (x_sz + o_sz))

    if resident_vmem(8) <= _VMEM_BUDGET:
        # --- R fully resident in VMEM; 1-D grid over row tiles only. -------
        tb = tb_cap
        while tb > 8 and resident_vmem(tb) > _VMEM_BUDGET:
            tb -= 8
        grid = (pl.cdiv(rows, tb),)
        y2d = pl.pallas_call(
            kernel,
            out_shape=jax.ShapeDtypeStruct((rows, dim_p), out_dtype),
            grid_spec=pltpu.PrefetchScalarGridSpec(
                num_scalar_prefetch=0,
                grid=grid,
                in_specs=[
                    pl.BlockSpec((tb, dim_p), lambda i: (i, 0)),      # x rows
                    pl.BlockSpec((dim_p, dim_p), lambda i: (0, 0)),   # R resident
                ],
                out_specs=pl.BlockSpec((tb, dim_p), lambda i: (i, 0)),
            ),
            compiler_params=pltpu.CompilerParams(
                dimension_semantics=("parallel",),
                vmem_limit_bytes=_VMEM_LIMIT),
            cost_estimate=cost,
        )(x2d, R)
    else:
        # --- Fallback: hold full column panels (dim_p, tn) of R resident ---
        # across the inner row sweep (panel-major grid).
        align_n = 256 if dim_p % 256 == 0 else 128    # fill 256x256 MXU (v6e/v7x)
        tn = _pick_tile(dim_p, 2048, align_n)

        def panel_vmem(tb, tn):
            return 2 * (dim_p * tn * r_sz + tb * dim_p * x_sz + tb * tn * o_sz)

        while tn > align_n and panel_vmem(8, tn) > _VMEM_BUDGET:
            tn = _pick_tile(dim_p, tn - align_n, align_n)
        tb = tb_cap
        while tb > 8 and panel_vmem(tb, tn) > _VMEM_BUDGET:
            tb -= 8

        grid = (dim_p // tn, pl.cdiv(rows, tb))       # panel axis outer -> reuse
        y2d = pl.pallas_call(
            kernel,
            out_shape=jax.ShapeDtypeStruct((rows, dim_p), out_dtype),
            grid_spec=pltpu.PrefetchScalarGridSpec(
                num_scalar_prefetch=0,
                grid=grid,
                in_specs=[
                    pl.BlockSpec((tb, dim_p), lambda j, i: (i, 0)),   # x rows
                    pl.BlockSpec((dim_p, tn), lambda j, i: (0, j)),   # R panel
                ],
                out_specs=pl.BlockSpec((tb, tn), lambda j, i: (i, j)),
            ),
            compiler_params=pltpu.CompilerParams(
                dimension_semantics=("arbitrary", "parallel"),
                vmem_limit_bytes=_VMEM_LIMIT),
            cost_estimate=cost,
        )(x2d, R)

    if dim_p != dim:
        y2d = y2d[:, :dim]
    return y2d.reshape(x.shape)                       # already in x.dtype


# ----------------------------------------------------------------------------
# Plain-JAX reference: the original sequential walk (for correctness check)
# ----------------------------------------------------------------------------
def _reference(x, angles, seed, n_steps):
    dim = angles.shape[0]
    x2d = x.reshape(-1, dim).astype(jnp.float32)
    ii, jj, cos_t, sin_t = _make_walk_schedule(dim, seed * 2, n_steps, angles)

    def body(t, v):
        i, j, c, s = ii[t], jj[t], cos_t[t], sin_t[t]
        xi = v[:, i]
        xj = v[:, j]
        v = v.at[:, i].set(c * xi + s * xj)
        v = v.at[:, j].set(-s * xi + c * xj)
        return v

    y2d = lax.fori_loop(0, n_steps, body, x2d)
    return y2d.reshape(x.shape).astype(x.dtype)


if __name__ == "__main__":
    dim = 32
    seed = 2024
    n_steps = math.ceil(math.log2(dim) * 0.3) * dim   # 64 for dim=32

    key = jax.random.PRNGKey(0)
    kx, ka = jax.random.split(key)
    # x: any shape whose flatten(-1, dim) works; (2, 8, 32) -> 16 rows.
    x = jax.random.normal(kx, (2, 8, dim), dtype=jnp.float32)
    # Module inits angles to zeros (identity walk); use small deterministic
    # nonzero angles so the test is non-trivial.
    angles = 0.1 * jax.random.normal(ka, (dim,), dtype=jnp.float32)

    y = parametric_kac_layer(x, angles, seed=seed, n_steps=n_steps)
    y = jax.block_until_ready(y)

    y_ref = _reference(x, angles, seed, n_steps)
    assert y.shape == x.shape and y.dtype == x.dtype
    # bf16 MXU operands with f32 accumulation vs sequential f32 walk:
    # tolerance loosened accordingly (worst-case element error ~2e-2 here).
    assert jnp.allclose(y, y_ref, atol=3e-2, rtol=3e-2), "mismatch vs reference"
    # Kac walk is orthogonal -> per-row norms preserved (to bf16 precision).
    assert jnp.allclose(
        jnp.linalg.norm(y.reshape(-1, dim).astype(jnp.float32), axis=1),
        jnp.linalg.norm(x.reshape(-1, dim).astype(jnp.float32), axis=1),
        atol=3e-2, rtol=3e-2,
    )

    print("KERNEL_OK")
</pallas_src>

<mosaic_0001>
module attributes {stable_mosaic.version = 11 : i64} {
  func.func @_kac_matmul_kernel(%arg0: i32, %arg1: memref<8x128xf32, #tpu.memory_space<vmem>>, %arg2: memref<128x128xbf16, #tpu.memory_space<vmem>>, %arg3: memref<8x128xf32, #tpu.memory_space<vmem>>) attributes {dimension_semantics = [#tpu.dimension_semantics<parallel>], iteration_bounds = array<i64: 2>, scalar_prefetch = 0 : i64, scratch_operands = 0 : i64, tpu.core_type = #tpu.core_type<tc>, window_params = [{transform_indices = @transform_0, window_bounds = array<i64: 8, 128>}, {pipeline_mode = #tpu.pipeline_mode<synchronous>, transform_indices = @transform_1, window_bounds = array<i64: 128, 128>}, {transform_indices = @transform_2, window_bounds = array<i64: 8, 128>}]} {
    %c0 = arith.constant 0 : index
    %c0_0 = arith.constant 0 : index
    %0 = vector.load %arg1[%c0, %c0_0] : memref<8x128xf32, #tpu.memory_space<vmem>>, vector<8x128xf32>
    %1 = arith.truncf %0 : vector<8x128xf32> to vector<8x128xbf16>
    %c0_1 = arith.constant 0 : index
    %c0_2 = arith.constant 0 : index
    %2 = vector.load %arg2[%c0_1, %c0_2] : memref<128x128xbf16, #tpu.memory_space<vmem>>, vector<128x128xbf16>
    %cst = arith.constant dense<0.000000e+00> : vector<8x128xf32>
    %3 = tpu.matmul %1, %2, %cst {dimension_numbers = #tpu.dot_dimension_numbers<[1], [0], [0], [1], [0, 0, 1, 1], [], []>} : vector<8x128xbf16>, vector<128x128xbf16>, vector<8x128xf32> -> vector<8x128xf32>
    %c0_3 = arith.constant 0 : index
    %c0_4 = arith.constant 0 : index
    %4 = vector.load %arg3[%c0_3, %c0_4] : memref<8x128xf32, #tpu.memory_space<vmem>>, vector<8x128xf32>
    tpu.vector_store %arg3[%c0_3, %c0_4], %3 {strides = array<i32>} : memref<8x128xf32, #tpu.memory_space<vmem>>, vector<8x128xf32>,
    return
  }
  func.func @transform_0(%arg0: i32) -> (i32, i32) {
    %c0_i32 = arith.constant 0 : i32
    %c0_i32_0 = arith.constant 0 : i32
    return %arg0, %c0_i32 : i32, i32
  }
  func.func @transform_1(%arg0: i32) -> (i32, i32) {
    %c0_i32 = arith.constant 0 : i32
    %c0_i32_0 = arith.constant 0 : i32
    %c0_i32_1 = arith.constant 0 : i32
    return %c0_i32, %c0_i32_0 : i32, i32
  }
  func.func @transform_2(%arg0: i32) -> (i32, i32) {
    %c0_i32 = arith.constant 0 : i32
    %c0_i32_0 = arith.constant 0 : i32
    return %arg0, %c0_i32 : i32, i32
  }
}

</mosaic_0001>

<llo_original>
// kernel: tpu_custom_call.1
$region0: #{tpu_custom_call.1}
  #allocation0 [shape = 'u32[]', space=smem, size = 0x4, offset = 0x4, fixed_abs, tag = 'smem constant byte address 0x4 - core index']
  #allocation1 [shape = 'u32[144,128]{1,0:T(1,128)}', space=vmem, size = 0x12000, scoped, tag = 'internal scratch']
  %s0 = inlined_call_operand.hbm [shape: f32[16,128], index: 0, kind: input, shape index: {}]
  %s1 = inlined_call_operand.hbm [shape: bf16[128,128], index: 1, kind: input, shape index: {}]
  %s2 = inlined_call_operand.hbm [shape: f32[16,128], index: 2, kind: output, shape index: {}]
  %s3 = sld [smem:[#allocation0]]
  $region49: #{tpu_custom_call.1} parent=0
    _
  %s5 = ssub.s32 1, %s3
  %s6 = scalar_select 0, %s5, %s3
  $region1: #{tpu_custom_call.1} parent=0
    #allocation2 [shape = 'u8[8192]{0}', space=vmem, size = 0x2000, scoped, tag = 'input window, operand 0']
    #allocation3 [shape = 's32[2]{0}', space=sflag, size = 0x8, scoped, tag = 'scoped memory for tpu_custom_call.1']
    #allocation4 [shape = 's32[2]{0}', space=sflag, size = 0x8, scoped, tag = 'scoped memory for tpu_custom_call.1']
    #allocation5 [shape = 'u8[32768]{0}', space=vmem, size = 0x8000, scoped, tag = 'input window, operand 1, single buffered']
    #allocation6 [shape = 's32[1]{0}', space=sflag, size = 0x4, scoped, tag = 'scoped memory for tpu_custom_call.1']
    #allocation7 [shape = 'u8[8192]{0}', space=vmem, size = 0x2000, scoped, tag = 'output window, operand 0']
    %7 = vsyncpa [#allocation3], 0
    %s8 = scalar_lea.sflag [#allocation3], 1
    %9 = vsyncpa %s8, 0
    %10 = vsyncpa [#allocation6], 0
    %11 = vsyncpa [#allocation4], 0
    %s12 = scalar_lea.sflag [#allocation4], 1
    %13 = vsyncpa %s12, 0
    loop: start=0, step=1, limit=4
    $region2: #{tpu_custom_call.1} parent=1 // loop_pre_header
      _
    $region3: #{tpu_custom_call.1} parent=1 // loop_header
      %s15 = sphi 0, %s19
      %p16 = scmp.ge.s32.totalorder %s15, 4
      %s25 = sphi 0, %s27
      %s28 = sphi 0, %s25
      %s29 = sphi 0, %s28
      %s45 = sphi 0, %s29
      %s49 = sphi 0, %s49
      %s51 = sphi 0, %s49
      %s52 = sphi 0, %s51
      %s66 = sphi 0, %s52
      %s72 = sphi 0, %s74
      %s75 = sphi 0, %s72
      %s76 = sphi 0, %s75
      %s92 = sphi 0, %s76
    $region4: #{tpu_custom_call.1} parent=1 // loop_header_branch
      %18 = sbr.rel (%p16) target = $region8
    $region5: #{tpu_custom_call.1} parent=1 // loop_body
      %s20 = ssub.s32 %s15, 1
      %s21 = ssub.s32 %s15, 2
      %s22 = sadd.s32 %s15, 1
      %s23 = ssub.s32 %s15, %s22
      %p24 = scmp.eq.s32.totalorder %s23, 0
      %s26 = sadd.s32 %s25, 1
      %s27 = scalar_select %p24, %s25, %s26
      %p30 = pneg %p24
      %p31 = scmp.eq.s32.totalorder %s15, 1
      %p32 = por %p30, %p31
      %p33 = scmp.ne.s32.totalorder %s25, %s28
      %p34 = scmp.eq.s32.totalorder %s15, 0
      %p35 = por %p33, %p34
      %p36 = scmp.ne.s32.totalorder %s25, %s28
      %p37 = scmp.eq.s32.totalorder %s20, 1
      %p38 = por %p36, %p37
      %p39 = scmp.ne.s32.totalorder %s28, %s29
      %p40 = scmp.eq.s32.totalorder %s20, 0
      %p41 = por %p39, %p40
      %p42 = scmp.ne.s32.totalorder %s28, %s29
      %p43 = scmp.eq.s32.totalorder %s21, 1
      %p44 = por %p42, %p43
      %p46 = scmp.ne.s32.totalorder %s29, %s45
      %p47 = scmp.eq.s32.totalorder %s21, 0
      %p48 = por %p46, %p47
      %s50 = sadd.s32 %s49, 1
      %p53 = scmp.eq.s32.totalorder %s15, 1
      %p54 = scmp.ne.s32.totalorder %s49, %s51
      %p55 = scmp.eq.s32.totalorder %s15, 0
      %p56 = por %p54, %p55
      %p57 = scmp.ne.s32.totalorder %s49, %s51
      %p58 = scmp.eq.s32.totalorder %s20, 1
      %p59 = por %p57, %p58
      %p60 = scmp.ne.s32.totalorder %s51, %s52
      %p61 = scmp.eq.s32.totalorder %s20, 0
      %p62 = por %p60, %p61
      %p63 = scmp.ne.s32.totalorder %s51, %s52
      %p64 = scmp.eq.s32.totalorder %s21, 1
      %p65 = por %p63, %p64
      %p67 = scmp.ne.s32.totalorder %s52, %s66
      %p68 = scmp.eq.s32.totalorder %s21, 0
      %p69 = por %p67, %p68
      %s70 = ssub.s32 %s15, %s22
      %p71 = scmp.eq.s32.totalorder %s70, 0
      %s73 = sadd.s32 %s72, 1
      %s74 = scalar_select %p71, %s72, %s73
      %p77 = pneg %p71
      %p78 = scmp.eq.s32.totalorder %s15, 1
      %p79 = por %p77, %p78
      %p80 = scmp.ne.s32.totalorder %s72, %s75
      %p81 = scmp.eq.s32.totalorder %s15, 0
      %p82 = por %p80, %p81
      %p83 = scmp.ne.s32.totalorder %s72, %s75
      %p84 = scmp.eq.s32.totalorder %s20, 1
      %p85 = por %p83, %p84
      %p86 = scmp.ne.s32.totalorder %s75, %s76
      %p87 = scmp.eq.s32.totalorder %s20, 0
      %p88 = por %p86, %p87
      %p89 = scmp.ne.s32.totalorder %s75, %s76
      %p90 = scmp.eq.s32.totalorder %s21, 1
      %p91 = por %p89, %p90
      %p93 = scmp.ne.s32.totalorder %s76, %s92
      %p94 = scmp.eq.s32.totalorder %s21, 0
      %p95 = por %p93, %p94
      %p96 = scmp.le.s32.totalorder 1, %s15
      %p97 = scmp.lt.s32.totalorder %s15, 3
      %p98 = pnand %p96, %p97
      %p99 = pneg %p98
      // Predicated region
      $region9: #{tpu_custom_call.1} parent=5 // pred_check
        _
      $region10: #{tpu_custom_call.1} parent=5 // pred_check_branch
        %101 = sbr.rel (%p98) target = $region12
      $region11: #{tpu_custom_call.1} parent=5 // pred_region
        %s102 = ssub.s32 %s15, 1
        // Predicated region
        $region13: #{tpu_custom_call.1} parent=11 // pred_check
          %p103 = pneg %p62
        $region14: #{tpu_custom_call.1} parent=11 // pred_check_branch
          %105 = sbr.rel (%p103) target = $region16
        $region15: #{tpu_custom_call.1} parent=11 // pred_region
          %s107 = ssub.s32 1024, 1024
          %108 = vsyncadd [#allocation6], %s107
          %s109 = sshll.u32 [#allocation5], 4
          %s110 = int_to_ptr.vmem [resolvable:$true] %s109
          %115 = dma.hbm_to_vmem [thread:$0]  %s1, 1024, %s110, [#allocation6], 64, 64, 4
        $region16: #{tpu_custom_call.1} parent=11 // pred_fallthru
          _
      $region12: #{tpu_custom_call.1} parent=5 // pred_fallthru
        _
      %p116 = scmp.lt.s32.totalorder %s15, 2
      // Predicated region
      $region17: #{tpu_custom_call.1} parent=5 // pred_check
        %p117 = pneg %p116
      $region18: #{tpu_custom_call.1} parent=5 // pred_check_branch
        %119 = sbr.rel (%p117) target = $region20
      $region19: #{tpu_custom_call.1} parent=5 // pred_region
        // Predicated region
        $region21: #{tpu_custom_call.1} parent=19 // pred_check
          %p120 = pneg %p35
        $region22: #{tpu_custom_call.1} parent=19 // pred_check_branch
          %122 = sbr.rel (%p120) target = $region24
        $region23: #{tpu_custom_call.1} parent=19 // pred_region
          %s123 = sand.u32 %s25, 1
          %s124 = scalar_lea.sflag [#allocation3], %s123
          %s125 = sand.u32 %s25, 1
          %s126 = smul.addr %s125, 8
          %s127 = scalar_lea.vmem [#allocation2], %s126
          %s129 = ssub.s32 128, 128
          %130 = vsyncadd %s124, %s129
          %s131 = smul.addr %s15, 128
          %s132 = scalar_lea.hbm %s0, %s131
          %s134 = sshll.u32 %s127, 4
          %s135 = int_to_ptr.vmem [resolvable:$true] %s134
          %137 = dma.hbm_to_vmem [thread:$0]  %s132, 128, %s135, %s124
        $region24: #{tpu_custom_call.1} parent=19 // pred_fallthru
          _
      $region20: #{tpu_custom_call.1} parent=5 // pred_fallthru
        _
      %p138 = scmp.le.s32.totalorder 1, %s15
      %p139 = scmp.lt.s32.totalorder %s15, 3
      %p140 = pnand %p138, %p139
      %p141 = pneg %p140
      // Predicated region
      $region25: #{tpu_custom_call.1} parent=5 // pred_check
        _
      $region26: #{tpu_custom_call.1} parent=5 // pred_check_branch
        %143 = sbr.rel (%p140) target = $region28
      $region27: #{tpu_custom_call.1} parent=5 // pred_region
        %s144 = ssub.s32 %s15, 1
        %s145 = sand.u32 %s28, 1
        %s146 = scalar_lea.sflag [#allocation3], %s145
        %s147 = sand.u32 %s28, 1
        %s148 = smul.addr %s147, 8
        %s149 = scalar_lea.vmem [#allocation2], %s148
        // Predicated region
        $region29: #{tpu_custom_call.1} parent=27 // pred_check
          %p150 = pneg %p41
        $region30: #{tpu_custom_call.1} parent=27 // pred_check_branch
          %152 = sbr.rel (%p150) target = $region32
        $region31: #{tpu_custom_call.1} parent=27 // pred_region
          %153 = dma.done %s146, 128
        $region32: #{tpu_custom_call.1} parent=27 // pred_fallthru
          _
        // Predicated region
        $region33: #{tpu_custom_call.1} parent=27 // pred_check
          %p154 = pneg %p62
        $region34: #{tpu_custom_call.1} parent=27 // pred_check_branch
          %156 = sbr.rel (%p154) target = $region36
        $region35: #{tpu_custom_call.1} parent=27 // pred_region
          %157 = dma.done [#allocation6], 1024
        $region36: #{tpu_custom_call.1} parent=27 // pred_fallthru
          _
        %s158 = sand.u32 %s28, 1
        %s159 = scalar_lea.sflag [#allocation3], %s158
        %s160 = sand.u32 %s28, 1
        %s161 = smul.addr %s160, 8
        %s162 = scalar_lea.vmem [#allocation2], %s161
        %p163 = pneg %p41
        %p164 = pneg %p38
        %p165 = pneg %p62
        %p166 = pneg %p59
        %p167 = pneg %p88
        %p168 = pneg %p85
        %s169 = sand.u32 %s75, 1
        %s170 = scalar_lea.sflag [#allocation4], %s169
        %s171 = sand.u32 %s75, 1
        %s172 = smul.addr %s171, 8
        %s173 = scalar_lea.vmem [#allocation7], %s172
        %v175 = vld [vmem:[%s149] sm:$0xff]
        %v176 = vpack.c.bf16 %v175, %v175
        %v177 = vld [vmem:[#allocation5] sm:$0xf]
        %v178 = vld [vmem:[#allocation5 + $0x4] sm:$0xf]
        %v179 = vld [vmem:[#allocation5 + $0x8] sm:$0xf]
        %v180 = vld [vmem:[#allocation5 + $0xc] sm:$0xf]
        %v181 = vld [vmem:[#allocation5 + $0x10] sm:$0xf]
        %v182 = vld [vmem:[#allocation5 + $0x14] sm:$0xf]
        %v183 = vld [vmem:[#allocation5 + $0x18] sm:$0xf]
        %v184 = vld [vmem:[#allocation5 + $0x1c] sm:$0xf]
        %v185 = vld [vmem:[#allocation5 + $0x20] sm:$0xf]
        %v186 = vld [vmem:[#allocation5 + $0x24] sm:$0xf]
        %v187 = vld [vmem:[#allocation5 + $0x28] sm:$0xf]
        %v188 = vld [vmem:[#allocation5 + $0x2c] sm:$0xf]
        %v189 = vld [vmem:[#allocation5 + $0x30] sm:$0xf]
        %v190 = vld [vmem:[#allocation5 + $0x34] sm:$0xf]
        %v191 = vld [vmem:[#allocation5 + $0x38] sm:$0xf]
        %v192 = vld [vmem:[#allocation5 + $0x3c] sm:$0xf]
        %v209 = vunpack.c.l.b16 %v177
        %v210 = vunpack.c.l.b16 %v178
        %v211 = vunpack.c.l.b16 %v179
        %v212 = vunpack.c.l.b16 %v180
        %v213 = vunpack.c.l.b16 %v181
        %v214 = vunpack.c.l.b16 %v182
        %v215 = vunpack.c.l.b16 %v183
        %v216 = vunpack.c.l.b16 %v184
        %v217 = vunpack.c.l.b16 %v185
        %v218 = vunpack.c.l.b16 %v186
        %v219 = vunpack.c.l.b16 %v187
        %v220 = vunpack.c.l.b16 %v188
        %v221 = vunpack.c.l.b16 %v189
        %v222 = vunpack.c.l.b16 %v190
        %v223 = vunpack.c.l.b16 %v191
        %v224 = vunpack.c.l.b16 %v192
        %v225 = vpack.c.b16 %v210, %v209
        %v226 = vpack.c.b16 %v212, %v211
        %v227 = vpack.c.b16 %v214, %v213
        %v228 = vpack.c.b16 %v216, %v215
        %v229 = vpack.c.b16 %v218, %v217
        %v230 = vpack.c.b16 %v220, %v219
        %v231 = vpack.c.b16 %v222, %v221
        %v232 = vpack.c.b16 %v224, %v223
        %241 = vmatprep.subr.bf16.mxu0 0
        %242 = vmatpush1.bf16.msra.mxu0 %v225
        %243 = vmatprep.subr.bf16.mxu0 0
        %244 = vmatpush1.bf16.msra.mxu0 %v226
        %245 = vmatprep.subr.bf16.mxu0 0
        %246 = vmatpush1.bf16.msra.mxu0 %v227
        %247 = vmatprep.subr.bf16.mxu0 0
        %248 = vmatpush1.bf16.msra.mxu0 %v228
        %249 = vmatprep.subr.bf16.mxu0 0
        %250 = vmatpush1.bf16.msra.mxu0 %v229
        %251 = vmatprep.subr.bf16.mxu0 0
        %252 = vmatpush1.bf16.msra.mxu0 %v230
        %253 = vmatprep.subr.bf16.mxu0 0
        %254 = vmatpush1.bf16.msra.mxu0 %v231
        %255 = vmatprep.subr.bf16.mxu0 0
        %256 = vmatpush1.bf16.msra.mxu0 %v232
        %257 = vmatprep.subr.bf16.mxu0 0
        %258 = vmatpush1.bf16.msra.mxu0 0
        %259 = vmatprep.subr.bf16.mxu0 0
        %260 = vmatpush1.bf16.msra.mxu0 0
        %261 = vmatprep.subr.bf16.mxu0 0
        %262 = vmatpush1.bf16.msra.mxu0 0
        %263 = vmatprep.subr.bf16.mxu0 0
        %264 = vmatpush1.bf16.msra.mxu0 0
        %265 = vmatprep.subr.bf16.mxu0 0
        %266 = vmatpush1.bf16.msra.mxu0 0
        %267 = vmatprep.subr.bf16.mxu0 0
        %268 = vmatpush1.bf16.msra.mxu0 0
        %269 = vmatprep.subr.bf16.mxu0 0
        %270 = vmatpush1.bf16.msra.mxu0 0
        %271 = vmatprep.subr.bf16.mxu0 0
        %272 = vmatpush1.bf16.msra.mxu0 0
        %273 = vmatprep.mubr.bf16.mxu0 0
        %274 = vmatmul.mubr.bf16.gmra.mrb[0].mxu0 %v176
        %v275 = vpop.f32.mrb[0].mxu0
        %v276 = vadd.f32 0.0, %v275
        %v277 = vpop.f32.mrb[0].mxu0
        %v278 = vpop.f32.mrb[0].mxu0
        %v279 = vpop.f32.mrb[0].mxu0
        %280 = vdwg.mxu0
        %281 = vst [vmem:[%s173] sm:$0xff] %v276
        %s282 = sand.u32 %s75, 1
        %s283 = scalar_lea.sflag [#allocation4], %s282
        %s284 = sand.u32 %s75, 1
        %s285 = smul.addr %s284, 8
        %s286 = scalar_lea.vmem [#allocation7], %s285
        // Predicated region
        $region37: #{tpu_custom_call.1} parent=27 // pred_check
          %p287 = pneg %p85
        $region38: #{tpu_custom_call.1} parent=27 // pred_check_branch
          %289 = sbr.rel (%p287) target = $region40
        $region39: #{tpu_custom_call.1} parent=27 // pred_region
          %s291 = ssub.s32 128, 128
          %292 = vsyncadd %s283, %s291
          %s293 = smul.addr %s20, 128
          %s294 = scalar_lea.hbm %s2, %s293
          %s296 = sshll.u32 %s286, 4
          %s297 = int_to_ptr.vmem [resolvable:$true] %s296
          %299 = dma.vmem_to_hbm [thread:$0]  %s297, 128, %s294, %s283
        $region40: #{tpu_custom_call.1} parent=27 // pred_fallthru
          _
      $region28: #{tpu_custom_call.1} parent=5 // pred_fallthru
        _
      %p300 = scmp.le.s32.totalorder 2, %s15
      // Predicated region
      $region41: #{tpu_custom_call.1} parent=5 // pred_check
        %p301 = pneg %p300
      $region42: #{tpu_custom_call.1} parent=5 // pred_check_branch
        %303 = sbr.rel (%p301) target = $region44
      $region43: #{tpu_custom_call.1} parent=5 // pred_region
        %s304 = ssub.s32 %s15, 2
        // Predicated region
        $region45: #{tpu_custom_call.1} parent=43 // pred_check
          %p305 = pneg %p91
        $region46: #{tpu_custom_call.1} parent=43 // pred_check_branch
          %307 = sbr.rel (%p305) target = $region48
        $region47: #{tpu_custom_call.1} parent=43 // pred_region
          %s308 = sand.u32 %s76, 1
          %s309 = scalar_lea.sflag [#allocation4], %s308
          %s310 = sand.u32 %s76, 1
          %s311 = smul.addr %s310, 8
          %s312 = scalar_lea.vmem [#allocation7], %s311
          %313 = dma.done %s309, 128
        $region48: #{tpu_custom_call.1} parent=43 // pred_fallthru
          _
      $region44: #{tpu_custom_call.1} parent=5 // pred_fallthru
        _
    $region6: #{tpu_custom_call.1} parent=1 // loop_footer
      %s19 = sadd.s32 1, %s15
    $region7: #{tpu_custom_call.1} parent=1 // loop_footer_branch
      %14 = sbr.rel target = $region3
    $region8: #{tpu_custom_call.1} parent=1 // loop_exit
      _
    %314 = vsyncpa [#allocation3], 1
    %s315 = scalar_lea.sflag [#allocation3], 1
    %316 = vsyncpa %s315, 1
    %317 = vsyncpa [#allocation6], 1
    %318 = vsyncpa [#allocation4], 1
    %s319 = scalar_lea.sflag [#allocation4], 1
    %320 = vsyncpa %s319, 1

</llo_original>
